<compile_context>
chip_gen: v7x
topology: tpu7x:2x2x1
jax: 0.10.0
libtpu: 0.0.40
codegen_flags: <defaults>
</compile_context>

<pallas_src>
import functools

import jax
import jax.numpy as jnp
from jax import lax
from jax.experimental import pallas as pl
from jax.experimental.pallas import tpu as pltpu

LANE = 128


def _round_up(x, m):
    return (x + m - 1) // m * m


# ----------------------------- Pallas kernel -------------------------------

def decoder_step_kernel(
    tok_ref,    # (B, 1)       int32  token ids
    h_ref,      # (B, Hp)      f32    previous hidden state (zero padded past H)
    emb_ref,    # (Vp, Ep)     f32    embedding table (zero padded)
    w_ih_ref,   # (Ep, 3*Hp)   f32    GRU input weights^T, gates [r|z|n], each 128-lane aligned
    w_hh_ref,   # (Hp, 3*Hp)   f32    GRU hidden weights^T, same layout
    b_i_ref,    # (1, 3*Hp)    f32    pre-combined biases [b_ih_r+b_hh_r | b_ih_z+b_hh_z | b_ih_n]
    b_hn_ref,   # (1, Hp)      f32    b_hh_n (must stay inside the r*(.) term)
    w_h2_ref,   # (Hp, H2p)    f32    hidden2 weights^T
    b_h2_ref,   # (1, H2p)     f32
    w_out_ref,  # (H2p, Vp)    f32    output weights^T (padded rows are zero)
    b_out_ref,  # (1, Vp)      f32
    out_ref,    # (B, Vp)      f32    logits (lane-dense)
    h_new_ref,  # (B, Hp)      f32    new hidden state
):
    B = tok_ref.shape[0]
    Vp = emb_ref.shape[0]
    Hp = h_ref.shape[-1]

    # Embedding lookup as a one-hot matmul (in-kernel gather, MXU-friendly).
    tok = tok_ref[...]                                              # (B, 1) int32
    vocab_iota = lax.broadcasted_iota(jnp.int32, (B, Vp), 1)        # (B, Vp)
    onehot = (tok == vocab_iota).astype(jnp.float32)                # (B, Vp)
    x = jnp.dot(onehot, emb_ref[...], preferred_element_type=jnp.float32)   # (B, Ep)

    h = h_ref[...]                                                  # (B, Hp)

    # GRU gate pre-activations (PyTorch gate order r, z, n); biases pre-combined.
    gi = jnp.dot(x, w_ih_ref[...], preferred_element_type=jnp.float32) + b_i_ref[...]
    gh = jnp.dot(h, w_hh_ref[...], preferred_element_type=jnp.float32)

    # Static, 128-lane-aligned gate slices.
    r = jax.nn.sigmoid(gi[:, 0:Hp] + gh[:, 0:Hp])
    z = jax.nn.sigmoid(gi[:, Hp:2 * Hp] + gh[:, Hp:2 * Hp])
    n = jnp.tanh(gi[:, 2 * Hp:3 * Hp] + r * (gh[:, 2 * Hp:3 * Hp] + b_hn_ref[...]))
    h_new = (1.0 - z) * n + z * h                                   # padded lanes stay 0

    # rnn_out = output( sigmoid( hidden2(h_new) ) )
    hid2 = jax.nn.sigmoid(
        jnp.dot(h_new, w_h2_ref[...], preferred_element_type=jnp.float32) + b_h2_ref[...]
    )
    logits = jnp.dot(hid2, w_out_ref[...], preferred_element_type=jnp.float32) + b_out_ref[...]

    out_ref[...] = logits          # full-width, unmasked store
    h_new_ref[...] = h_new


# ------------------------------ JAX wrapper ---------------------------------

def decoder_forward(kparams, in_token, h_t, output_size):
    """Mirror of Decoder.forward.

    in_token: int32 (1, B)     -- one token per batch element (seq len 1)
    h_t:      f32   (1, B, H)  -- GRU hidden state (num_layers=1)
    returns:  (rnn_out (1, B, V), h_new (1, B, H))
    """
    tok = in_token[0].astype(jnp.int32).reshape(-1, 1)     # (B, 1)
    h = h_t[0]                                             # (B, H)
    B, H = h.shape

    Ep = kparams["emb"].shape[1]
    Hp = kparams["w_hh_T"].shape[0]
    H2p = kparams["w_h2_T"].shape[1]
    Vp = kparams["w_out_T"].shape[1]

    h_pad = jnp.pad(h, ((0, 0), (0, Hp - H)))              # zero-pad hidden lanes

    args = (
        tok, h_pad,
        kparams["emb"], kparams["w_ih_T"], kparams["w_hh_T"],
        kparams["b_i"], kparams["b_hn"],
        kparams["w_h2_T"], kparams["b_h2"],
        kparams["w_out_T"], kparams["b_out"],
    )

    flops = 2 * B * (Vp * Ep + Ep * 3 * Hp + Hp * 3 * Hp + Hp * H2p + H2p * Vp)
    transcendentals = B * (3 * Hp + H2p)
    bytes_accessed = sum(int(a.size) * a.dtype.itemsize for a in args) \
        + (B * Vp + B * Hp) * 4

    vmem = pl.BlockSpec(memory_space=pltpu.MemorySpace.VMEM)

    out_pad, h_new_pad = pl.pallas_call(
        decoder_step_kernel,
        out_shape=(
            jax.ShapeDtypeStruct((B, Vp), jnp.float32),
            jax.ShapeDtypeStruct((B, Hp), jnp.float32),
        ),
        in_specs=[vmem] * len(args),
        out_specs=(vmem, vmem),
        # Carry the hidden state in place across decode steps.
        input_output_aliases={1: 1},
        cost_estimate=pl.CostEstimate(
            flops=flops, transcendentals=transcendentals, bytes_accessed=bytes_accessed),
    )(*args)

    logits = out_pad[:, :output_size]                      # slice back to true V
    h_new = h_new_pad[:, :H]                               # slice back to true H
    return logits[None, :, :], h_new[None, :, :]


# pure-JAX reference (unpadded params) for verification
def decoder_forward_ref(raw, in_token, h_t):
    tok = in_token[0]
    h = h_t[0]
    H = h.shape[-1]
    x = raw["embedding"][tok]
    gi = x @ raw["w_ih"].T + raw["b_ih"]
    gh = h @ raw["w_hh"].T + raw["b_hh"]
    r = jax.nn.sigmoid(gi[:, :H] + gh[:, :H])
    z = jax.nn.sigmoid(gi[:, H:2 * H] + gh[:, H:2 * H])
    n = jnp.tanh(gi[:, 2 * H:] + r * gh[:, 2 * H:])
    h_new = (1.0 - z) * n + z * h
    hid2 = jax.nn.sigmoid(h_new @ raw["w_h2"].T + raw["b_h2"])
    out = hid2 @ raw["w_out"].T + raw["b_out"]
    return out[None], h_new[None]


# ------------------------- deterministic parameter init ---------------------

def init_params(key, embedding_size, hidden_size, output_size, hidden_size_2=300):
    E, H, V, H2 = embedding_size, hidden_size, output_size, hidden_size_2
    ks = jax.random.split(key, 7)

    # ---- raw (logical) parameters, mirroring the PyTorch module init ----
    embedding = jax.random.normal(ks[0], (V, E), jnp.float32)                     # N(0,1)
    w_ih = jax.random.normal(ks[1], (3 * H, E), jnp.float32) * jnp.sqrt(2.0 / E)  # kaiming
    q, _ = jnp.linalg.qr(jax.random.normal(ks[2], (H, H), jnp.float32))
    w_hh = jnp.concatenate([q, -q, q.T], axis=0)                                  # ~orthogonal (3H, H)
    b_ih = jnp.zeros((3 * H,), jnp.float32)                                       # GRU biases = 0
    b_hh = jnp.zeros((3 * H,), jnp.float32)

    lim2 = 1.0 / jnp.sqrt(jnp.float32(H))
    w_h2 = jax.random.uniform(ks[3], (H2, H), jnp.float32, -lim2, lim2)
    b_h2 = jax.random.uniform(ks[4], (H2,), jnp.float32, -lim2, lim2)
    limo = 1.0 / jnp.sqrt(jnp.float32(H2))
    w_out = jax.random.uniform(ks[5], (V, H2), jnp.float32, -limo, limo)
    b_out = jax.random.uniform(ks[6], (V,), jnp.float32, -limo, limo)

    raw = dict(embedding=embedding, w_ih=w_ih, w_hh=w_hh, b_ih=b_ih, b_hh=b_hh,
               w_h2=w_h2, b_h2=b_h2, w_out=w_out, b_out=b_out)

    # ---- padded, 128-lane-aligned kernel parameters (zero padding) ----
    Ep = _round_up(E, LANE)
    Hp = _round_up(H, LANE)
    H2p = _round_up(H2, LANE)
    Vp = _round_up(V, LANE)

    emb_p = jnp.zeros((Vp, Ep), jnp.float32).at[:V, :E].set(embedding)

    def pack_gates(w, rows, rows_p):
        # w: (3H, rows)  ->  (rows_p, 3*Hp), each gate starting on a 128-lane boundary.
        out = jnp.zeros((rows_p, 3 * Hp), jnp.float32)
        for g in range(3):
            out = out.at[:rows, g * Hp:g * Hp + H].set(w[g * H:(g + 1) * H, :].T)
        return out

    w_ih_T = pack_gates(w_ih, E, Ep)      # (Ep, 3Hp)
    w_hh_T = pack_gates(w_hh, H, Hp)      # (Hp, 3Hp)

    # Pre-combined biases: r/z gates merged, input part of n; b_hh_n kept separate.
    b_i = jnp.zeros((1, 3 * Hp), jnp.float32)
    b_i = b_i.at[0, 0:H].set(b_ih[0:H] + b_hh[0:H])
    b_i = b_i.at[0, Hp:Hp + H].set(b_ih[H:2 * H] + b_hh[H:2 * H])
    b_i = b_i.at[0, 2 * Hp:2 * Hp + H].set(b_ih[2 * H:3 * H])
    b_hn = jnp.zeros((1, Hp), jnp.float32).at[0, :H].set(b_hh[2 * H:3 * H])

    w_h2_T = jnp.zeros((Hp, H2p), jnp.float32).at[:H, :H2].set(w_h2.T)
    b_h2_p = jnp.zeros((1, H2p), jnp.float32).at[0, :H2].set(b_h2)
    # Padded rows of w_out_T MUST be zero so sigmoid(0)=0.5 padded hid2 lanes don't leak.
    w_out_T = jnp.zeros((H2p, Vp), jnp.float32).at[:H2, :V].set(w_out.T)
    b_out_p = jnp.zeros((1, Vp), jnp.float32).at[0, :V].set(b_out)

    kern = dict(emb=emb_p, w_ih_T=w_ih_T, w_hh_T=w_hh_T, b_i=b_i, b_hn=b_hn,
                w_h2_T=w_h2_T, b_h2=b_h2_p, w_out_T=w_out_T, b_out=b_out_p)
    return kern, raw


# ----------------------------------- main ------------------------------------

if __name__ == "__main__":
    B = 8                # batch
    E = 32               # embedding_size
    H = 32               # hidden_size
    V = 4                # output_size (len(VOCAB))
    BOS_token = 0

    key = jax.random.PRNGKey(0)
    kp, kh, kt = jax.random.split(key, 3)
    kparams, raw = init_params(kp, E, H, V)

    # Inputs mirroring Decoder.loss/decode usage: token ids + a hidden state.
    in_token = jax.random.randint(kt, (1, B), 0, V).astype(jnp.int32)   # (seq=1, B)
    in_token = in_token.at[0, 0].set(BOS_token)
    h_t = jax.random.normal(kh, (1, B, H), jnp.float32)                 # (num_layers=1, B, H)

    fwd = jax.jit(decoder_forward, static_argnums=3)
    out, h_new = fwd(kparams, in_token, h_t, V)
    jax.block_until_ready((out, h_new))

    out_ref, h_new_ref = decoder_forward_ref(raw, in_token, h_t)
    assert out.shape == (1, B, V) and h_new.shape == (1, B, H)
    assert jnp.allclose(out, out_ref, atol=1e-4, rtol=1e-4), \
        float(jnp.max(jnp.abs(out - out_ref)))
    assert jnp.allclose(h_new, h_new_ref, atol=1e-4, rtol=1e-4), \
        float(jnp.max(jnp.abs(h_new - h_new_ref)))

    print("KERNEL_OK")
</pallas_src>

<mosaic_0001>
module attributes {stable_mosaic.version = 11 : i64} {
  func.func @decoder_step_kernel(%arg0: memref<8x1xi32, #tpu.memory_space<vmem>>, %arg1: memref<8x128xf32, #tpu.memory_space<vmem>>, %arg2: memref<128x128xf32, #tpu.memory_space<vmem>>, %arg3: memref<128x384xf32, #tpu.memory_space<vmem>>, %arg4: memref<128x384xf32, #tpu.memory_space<vmem>>, %arg5: memref<1x384xf32, #tpu.memory_space<vmem>>, %arg6: memref<1x128xf32, #tpu.memory_space<vmem>>, %arg7: memref<128x384xf32, #tpu.memory_space<vmem>>, %arg8: memref<1x384xf32, #tpu.memory_space<vmem>>, %arg9: memref<384x128xf32, #tpu.memory_space<vmem>>, %arg10: memref<1x128xf32, #tpu.memory_space<vmem>>, %arg11: memref<8x128xf32, #tpu.memory_space<vmem>>, %arg12: memref<8x128xf32, #tpu.memory_space<vmem>>) attributes {dimension_semantics = [], scalar_prefetch = 0 : i64, scratch_operands = 0 : i64, tpu.core_type = #tpu.core_type<tc>} {
    %c0 = arith.constant 0 : index
    %c0_0 = arith.constant 0 : index
    %0 = vector.load %arg0[%c0, %c0_0] : memref<8x1xi32, #tpu.memory_space<vmem>>, vector<8x1xi32>
    %1 = tpu.iota {dimensions = array<i32: 1>} : vector<8x128xi32>
    %2 = vector.broadcast %0 : vector<8x1xi32> to vector<8x128xi32>
    %3 = arith.cmpi eq, %2, %1 : vector<8x128xi32>
    %4 = arith.extui %3 : vector<8x128xi1> to vector<8x128xi32>
    %5 = arith.sitofp %4 : vector<8x128xi32> to vector<8x128xf32>
    %c0_1 = arith.constant 0 : index
    %c0_2 = arith.constant 0 : index
    %6 = vector.load %arg2[%c0_1, %c0_2] : memref<128x128xf32, #tpu.memory_space<vmem>>, vector<128x128xf32>
    %cst = arith.constant dense<0.000000e+00> : vector<8x128xf32>
    %7 = tpu.matmul %5, %6, %cst {dimension_numbers = #tpu.dot_dimension_numbers<[1], [0], [0], [1], [0, 0, 1, 1], [], []>} : vector<8x128xf32>, vector<128x128xf32>, vector<8x128xf32> -> vector<8x128xf32>
    %c0_3 = arith.constant 0 : index
    %c0_4 = arith.constant 0 : index
    %8 = vector.load %arg1[%c0_3, %c0_4] : memref<8x128xf32, #tpu.memory_space<vmem>>, vector<8x128xf32>
    %c0_5 = arith.constant 0 : index
    %c0_6 = arith.constant 0 : index
    %9 = vector.load %arg3[%c0_5, %c0_6] : memref<128x384xf32, #tpu.memory_space<vmem>>, vector<128x384xf32>
    %cst_7 = arith.constant dense<0.000000e+00> : vector<8x384xf32>
    %10 = tpu.matmul %7, %9, %cst_7 {dimension_numbers = #tpu.dot_dimension_numbers<[1], [0], [0], [1], [0, 0, 1, 1], [], []>} : vector<8x128xf32>, vector<128x384xf32>, vector<8x384xf32> -> vector<8x384xf32>
    %c0_8 = arith.constant 0 : index
    %c0_9 = arith.constant 0 : index
    %11 = vector.load %arg5[%c0_8, %c0_9] : memref<1x384xf32, #tpu.memory_space<vmem>>, vector<1x384xf32>
    %12 = vector.broadcast %11 : vector<1x384xf32> to vector<8x384xf32>
    %13 = arith.addf %10, %12 : vector<8x384xf32>
    %c0_10 = arith.constant 0 : index
    %c0_11 = arith.constant 0 : index
    %14 = vector.load %arg4[%c0_10, %c0_11] : memref<128x384xf32, #tpu.memory_space<vmem>>, vector<128x384xf32>
    %cst_12 = arith.constant dense<0.000000e+00> : vector<8x384xf32>
    %15 = tpu.matmul %8, %14, %cst_12 {dimension_numbers = #tpu.dot_dimension_numbers<[1], [0], [0], [1], [0, 0, 1, 1], [], []>} : vector<8x128xf32>, vector<128x384xf32>, vector<8x384xf32> -> vector<8x384xf32>
    %16 = vector.extract_strided_slice %13 {offsets = [0, 0], sizes = [8, 128], strides = [1, 1]} : vector<8x384xf32> to vector<8x128xf32>
    %17 = vector.extract_strided_slice %15 {offsets = [0, 0], sizes = [8, 128], strides = [1, 1]} : vector<8x384xf32> to vector<8x128xf32>
    %18 = arith.addf %16, %17 : vector<8x128xf32>
    %19 = arith.negf %18 : vector<8x128xf32>
    %20 = math.exp %19 : vector<8x128xf32>
    %cst_13 = arith.constant 1.000000e+00 : f32
    %21 = vector.broadcast %cst_13 : f32 to vector<8x128xf32>
    %22 = arith.addf %21, %20 : vector<8x128xf32>
    %23 = arith.divf %21, %22 : vector<8x128xf32>
    %24 = vector.extract_strided_slice %13 {offsets = [0, 128], sizes = [8, 128], strides = [1, 1]} : vector<8x384xf32> to vector<8x128xf32>
    %25 = vector.extract_strided_slice %15 {offsets = [0, 128], sizes = [8, 128], strides = [1, 1]} : vector<8x384xf32> to vector<8x128xf32>
    %26 = arith.addf %24, %25 : vector<8x128xf32>
    %27 = arith.negf %26 : vector<8x128xf32>
    %28 = math.exp %27 : vector<8x128xf32>
    %cst_14 = arith.constant 1.000000e+00 : f32
    %29 = vector.broadcast %cst_14 : f32 to vector<8x128xf32>
    %30 = arith.addf %29, %28 : vector<8x128xf32>
    %31 = arith.divf %29, %30 : vector<8x128xf32>
    %32 = vector.extract_strided_slice %13 {offsets = [0, 256], sizes = [8, 128], strides = [1, 1]} : vector<8x384xf32> to vector<8x128xf32>
    %33 = vector.extract_strided_slice %15 {offsets = [0, 256], sizes = [8, 128], strides = [1, 1]} : vector<8x384xf32> to vector<8x128xf32>
    %c0_15 = arith.constant 0 : index
    %c0_16 = arith.constant 0 : index
    %34 = vector.load %arg6[%c0_15, %c0_16] : memref<1x128xf32, #tpu.memory_space<vmem>>, vector<1x128xf32>
    %35 = vector.broadcast %34 : vector<1x128xf32> to vector<8x128xf32>
    %36 = arith.addf %33, %35 : vector<8x128xf32>
    %37 = arith.mulf %23, %36 : vector<8x128xf32>
    %38 = arith.addf %32, %37 : vector<8x128xf32>
    %39 = math.tanh %38 : vector<8x128xf32>
    %cst_17 = arith.constant 1.000000e+00 : f32
    %40 = vector.broadcast %cst_17 : f32 to vector<8x128xf32>
    %41 = arith.subf %40, %31 : vector<8x128xf32>
    %42 = arith.mulf %41, %39 : vector<8x128xf32>
    %43 = arith.mulf %31, %8 : vector<8x128xf32>
    %44 = arith.addf %42, %43 : vector<8x128xf32>
    %c0_18 = arith.constant 0 : index
    %c0_19 = arith.constant 0 : index
    %45 = vector.load %arg7[%c0_18, %c0_19] : memref<128x384xf32, #tpu.memory_space<vmem>>, vector<128x384xf32>
    %cst_20 = arith.constant dense<0.000000e+00> : vector<8x384xf32>
    %46 = tpu.matmul %44, %45, %cst_20 {dimension_numbers = #tpu.dot_dimension_numbers<[1], [0], [0], [1], [0, 0, 1, 1], [], []>} : vector<8x128xf32>, vector<128x384xf32>, vector<8x384xf32> -> vector<8x384xf32>
    %c0_21 = arith.constant 0 : index
    %c0_22 = arith.constant 0 : index
    %47 = vector.load %arg8[%c0_21, %c0_22] : memref<1x384xf32, #tpu.memory_space<vmem>>, vector<1x384xf32>
    %48 = vector.broadcast %47 : vector<1x384xf32> to vector<8x384xf32>
    %49 = arith.addf %46, %48 : vector<8x384xf32>
    %50 = arith.negf %49 : vector<8x384xf32>
    %51 = math.exp %50 : vector<8x384xf32>
    %cst_23 = arith.constant 1.000000e+00 : f32
    %52 = vector.broadcast %cst_23 : f32 to vector<8x384xf32>
    %53 = arith.addf %52, %51 : vector<8x384xf32>
    %54 = arith.divf %52, %53 : vector<8x384xf32>
    %c0_24 = arith.constant 0 : index
    %c0_25 = arith.constant 0 : index
    %55 = vector.load %arg9[%c0_24, %c0_25] : memref<384x128xf32, #tpu.memory_space<vmem>>, vector<384x128xf32>
    %cst_26 = arith.constant dense<0.000000e+00> : vector<8x128xf32>
    %56 = tpu.matmul %54, %55, %cst_26 {dimension_numbers = #tpu.dot_dimension_numbers<[1], [0], [0], [1], [0, 0, 1, 1], [], []>} : vector<8x384xf32>, vector<384x128xf32>, vector<8x128xf32> -> vector<8x128xf32>
    %c0_27 = arith.constant 0 : index
    %c0_28 = arith.constant 0 : index
    %57 = vector.load %arg10[%c0_27, %c0_28] : memref<1x128xf32, #tpu.memory_space<vmem>>, vector<1x128xf32>
    %58 = vector.broadcast %57 : vector<1x128xf32> to vector<8x128xf32>
    %59 = arith.addf %56, %58 : vector<8x128xf32>
    %c0_29 = arith.constant 0 : index
    %c0_30 = arith.constant 0 : index
    %60 = vector.load %arg11[%c0_29, %c0_30] : memref<8x128xf32, #tpu.memory_space<vmem>>, vector<8x128xf32>
    tpu.vector_store %arg11[%c0_29, %c0_30], %59 {strides = array<i32>} : memref<8x128xf32, #tpu.memory_space<vmem>>, vector<8x128xf32>,
    %c0_31 = arith.constant 0 : index
    %c0_32 = arith.constant 0 : index
    %61 = vector.load %arg12[%c0_31, %c0_32] : memref<8x128xf32, #tpu.memory_space<vmem>>, vector<8x128xf32>
    tpu.vector_store %arg12[%c0_31, %c0_32], %44 {strides = array<i32>} : memref<8x128xf32, #tpu.memory_space<vmem>>, vector<8x128xf32>,
    return
  }
}

</mosaic_0001>

<llo_original>
// kernel: decoder_forward.1
$region0: #{decoder_forward.1}
  #allocation0 [shape = 'u32[]', space=smem, size = 0x4, offset = 0x4, fixed_abs, tag = 'smem constant byte address 0x4 - core index']
  #allocation1 [shape = 'u32[144,128]{1,0:T(1,128)}', space=vmem, size = 0x12000, scoped, tag = 'internal scratch']
  %s0 = inlined_call_operand.vmem [shape: s32[8,1], index: 0, kind: input, shape index: {}]
  %s1 = inlined_call_operand.vmem [shape: f32[8,128], index: 1, kind: input, shape index: {}, may-alias: {1,12}]
  %s2 = inlined_call_operand.hbm [shape: f32[128,128], index: 2, kind: input, shape index: {}]
  %s3 = inlined_call_operand.hbm [shape: f32[128,384], index: 3, kind: input, shape index: {}]
  %s4 = inlined_call_operand.hbm [shape: f32[128,384], index: 4, kind: input, shape index: {}]
  %s5 = inlined_call_operand.vmem [shape: f32[1,384], index: 5, kind: input, shape index: {}]
  %s6 = inlined_call_operand.vmem [shape: f32[1,128], index: 6, kind: input, shape index: {}]
  %s7 = inlined_call_operand.hbm [shape: f32[128,384], index: 7, kind: input, shape index: {}]
  %s8 = inlined_call_operand.vmem [shape: f32[1,384], index: 8, kind: input, shape index: {}]
  %s9 = inlined_call_operand.hbm [shape: f32[384,128], index: 9, kind: input, shape index: {}]
  %s10 = inlined_call_operand.vmem [shape: f32[1,128], index: 10, kind: input, shape index: {}]
  %s11 = inlined_call_operand.vmem [shape: f32[8,128], index: 11, kind: output, shape index: {0}]
  %s12 = inlined_call_operand.vmem [shape: f32[8,128], index: 12, kind: output, shape index: {1}, may-alias: {1,12}]
  %13 = xla_tuple %s11, %s12
  %s14 = sld [smem:[#allocation0]]
  $region82: #{decoder_forward.1} parent=0
    _
  %s16 = ssub.s32 1, %s14
  %s17 = scalar_select 0, %s16, %s14
  $region1: #{decoder_forward.1} parent=0
    #allocation2 [shape = 'u8[65536]{0}', space=vmem, size = 0x10000, scoped, tag = 'input window, operand 2, single buffered']
    #allocation3 [shape = 's32[1]{0}', space=sflag, size = 0x4, scoped, tag = 'scoped memory for decoder_forward.1']
    #allocation4 [shape = 'u8[196608]{0}', space=vmem, size = 0x30000, scoped, tag = 'input window, operand 3, single buffered']
    #allocation5 [shape = 's32[1]{0}', space=sflag, size = 0x4, scoped, tag = 'scoped memory for decoder_forward.1']
    #allocation6 [shape = 'u8[196608]{0}', space=vmem, size = 0x30000, scoped, tag = 'input window, operand 4, single buffered']
    #allocation7 [shape = 'u8[196608]{0}', space=vmem, size = 0x30000, scoped, tag = 'input window, operand 7, single buffered']
    #allocation8 [shape = 's32[1]{0}', space=sflag, size = 0x4, scoped, tag = 'scoped memory for decoder_forward.1']
    #allocation9 [shape = 'u8[196608]{0}', space=vmem, size = 0x30000, scoped, tag = 'input window, operand 9, single buffered']
    %18 = vsyncpa [#allocation3], 0
    %19 = vsyncpa [#allocation5], 0
    %20 = vsyncpa [#allocation8], 0
    // Predicated region
    $region2: #{decoder_forward.1} parent=1 // pred_check
      _
    $region3: #{decoder_forward.1} parent=1 // pred_check_branch
      %22 = sbr.rel (0) target = $region5
    $region4: #{decoder_forward.1} parent=1 // pred_region
      _
    $region5: #{decoder_forward.1} parent=1 // pred_fallthru
      _
    // Predicated region
    $region6: #{decoder_forward.1} parent=1 // pred_check
      _
    $region7: #{decoder_forward.1} parent=1 // pred_check_branch
      %24 = sbr.rel (0) target = $region9
    $region8: #{decoder_forward.1} parent=1 // pred_region
      _
    $region9: #{decoder_forward.1} parent=1 // pred_fallthru
      _
    // Predicated region
    $region10: #{decoder_forward.1} parent=1 // pred_check
      _
    $region11: #{decoder_forward.1} parent=1 // pred_check_branch
      %26 = sbr.rel (0) target = $region13
    $region12: #{decoder_forward.1} parent=1 // pred_region
      %s28 = ssub.s32 2048, 2048
      %29 = vsyncadd [#allocation3], %s28
      %s30 = sshll.u32 [#allocation2], 4
      %s31 = int_to_ptr.vmem [resolvable:$true] %s30
      %36 = dma.hbm_to_vmem [thread:$0]  %s2, 2048, %s31, [#allocation3], 128, 128, 8
    $region13: #{decoder_forward.1} parent=1 // pred_fallthru
      _
    // Predicated region
    $region14: #{decoder_forward.1} parent=1 // pred_check
      _
    $region15: #{decoder_forward.1} parent=1 // pred_check_branch
      %38 = sbr.rel (0) target = $region17
    $region16: #{decoder_forward.1} parent=1 // pred_region
      %s40 = ssub.s32 6144, 6144
      %41 = vsyncadd [#allocation5], %s40
      %s42 = sshll.u32 [#allocation4], 4
      %s43 = int_to_ptr.vmem [resolvable:$true] %s42
      %48 = dma.hbm_to_vmem [thread:$0]  %s3, 6144, %s43, [#allocation5], 384, 384, 24
    $region17: #{decoder_forward.1} parent=1 // pred_fallthru
      _
    // Predicated region
    $region18: #{decoder_forward.1} parent=1 // pred_check
      _
    $region19: #{decoder_forward.1} parent=1 // pred_check_branch
      %50 = sbr.rel (0) target = $region21
    $region20: #{decoder_forward.1} parent=1 // pred_region
      %s52 = ssub.s32 6144, 6144
      %53 = vsyncadd [#allocation5], %s52
      %s54 = sshll.u32 [#allocation6], 4
      %s55 = int_to_ptr.vmem [resolvable:$true] %s54
      %60 = dma.hbm_to_vmem [thread:$0]  %s4, 6144, %s55, [#allocation5], 384, 384, 24
    $region21: #{decoder_forward.1} parent=1 // pred_fallthru
      _
    // Predicated region
    $region22: #{decoder_forward.1} parent=1 // pred_check
      _
    $region23: #{decoder_forward.1} parent=1 // pred_check_branch
      %62 = sbr.rel (0) target = $region25
    $region24: #{decoder_forward.1} parent=1 // pred_region
      _
    $region25: #{decoder_forward.1} parent=1 // pred_fallthru
      _
    // Predicated region
    $region26: #{decoder_forward.1} parent=1 // pred_check
      _
    $region27: #{decoder_forward.1} parent=1 // pred_check_branch
      %64 = sbr.rel (0) target = $region29
    $region28: #{decoder_forward.1} parent=1 // pred_region
      _
    $region29: #{decoder_forward.1} parent=1 // pred_fallthru
      _
    // Predicated region
    $region30: #{decoder_forward.1} parent=1 // pred_check
      _
    $region31: #{decoder_forward.1} parent=1 // pred_check_branch
      %66 = sbr.rel (0) target = $region33
    $region32: #{decoder_forward.1} parent=1 // pred_region
      %s68 = ssub.s32 6144, 6144
      %69 = vsyncadd [#allocation8], %s68
      %s70 = sshll.u32 [#allocation7], 4
      %s71 = int_to_ptr.vmem [resolvable:$true] %s70
      %76 = dma.hbm_to_vmem [thread:$0]  %s7, 6144, %s71, [#allocation8], 384, 384, 24
    $region33: #{decoder_forward.1} parent=1 // pred_fallthru
      _
    // Predicated region
    $region34: #{decoder_forward.1} parent=1 // pred_check
      _
    $region35: #{decoder_forward.1} parent=1 // pred_check_branch
      %78 = sbr.rel (0) target = $region37
    $region36: #{decoder_forward.1} parent=1 // pred_region
      _
    $region37: #{decoder_forward.1} parent=1 // pred_fallthru
      _
    // Predicated region
    $region38: #{decoder_forward.1} parent=1 // pred_check
      _
    $region39: #{decoder_forward.1} parent=1 // pred_check_branch
      %80 = sbr.rel (0) target = $region41
    $region40: #{decoder_forward.1} parent=1 // pred_region
      %s82 = ssub.s32 6144, 6144
      %83 = vsyncadd [#allocation8], %s82
      %s84 = sshll.u32 [#allocation9], 4
      %s85 = int_to_ptr.vmem [resolvable:$true] %s84
      %90 = dma.hbm_to_vmem [thread:$0]  %s9, 6144, %s85, [#allocation8], 128, 128, 8
    $region41: #{decoder_forward.1} parent=1 // pred_fallthru
      _
    // Predicated region
    $region42: #{decoder_forward.1} parent=1 // pred_check
      _
    $region43: #{decoder_forward.1} parent=1 // pred_check_branch
      %92 = sbr.rel (0) target = $region45
    $region44: #{decoder_forward.1} parent=1 // pred_region
      _
    $region45: #{decoder_forward.1} parent=1 // pred_fallthru
      _
    // Predicated region
    $region46: #{decoder_forward.1} parent=1 // pred_check
      _
    $region47: #{decoder_forward.1} parent=1 // pred_check_branch
      %94 = sbr.rel (0) target = $region49
    $region48: #{decoder_forward.1} parent=1 // pred_region
      %95 = dma.done [#allocation3], 2048
    $region49: #{decoder_forward.1} parent=1 // pred_fallthru
      _
    // Predicated region
    $region50: #{decoder_forward.1} parent=1 // pred_check
      _
    $region51: #{decoder_forward.1} parent=1 // pred_check_branch
      %97 = sbr.rel (0) target = $region53
    $region52: #{decoder_forward.1} parent=1 // pred_region
      %98 = dma.done [#allocation5], 6144
    $region53: #{decoder_forward.1} parent=1 // pred_fallthru
      _
    // Predicated region
    $region54: #{decoder_forward.1} parent=1 // pred_check
      _
    $region55: #{decoder_forward.1} parent=1 // pred_check_branch
      %100 = sbr.rel (0) target = $region57
    $region56: #{decoder_forward.1} parent=1 // pred_region
      %101 = dma.done [#allocation5], 6144
    $region57: #{decoder_forward.1} parent=1 // pred_fallthru
      _
    // Predicated region
    $region58: #{decoder_forward.1} parent=1 // pred_check
      _
    $region59: #{decoder_forward.1} parent=1 // pred_check_branch
      %103 = sbr.rel (0) target = $region61
    $region60: #{decoder_forward.1} parent=1 // pred_region
      %104 = dma.done [#allocation8], 6144
    $region61: #{decoder_forward.1} parent=1 // pred_fallthru
      _
    // Predicated region
    $region62: #{decoder_forward.1} parent=1 // pred_check
      _
    $region63: #{decoder_forward.1} parent=1 // pred_check_branch
      %106 = sbr.rel (0) target = $region65
    $region64: #{decoder_forward.1} parent=1 // pred_region
      %107 = dma.done [#allocation8], 6144
    $region65: #{decoder_forward.1} parent=1 // pred_fallthru
      _
    %v108 = vld [vmem:[%s0] sm:$0xff]
    %v109 = vlaneseq
    %v110 = vand.u32 %v109, 127
    %111 = vset.pattern.permute.xlu0 0
    %112 = vperm.xlu0 %111, %v108
    %v113 = vpop.permute.xlu0 %112
    %vm114 = vcmp.eq.s32.totalorder %v113, %v110
    %v115 = vsel %vm114, 1, 0
    %v116 = vcvt.s32.f32 %v115
    %v117 = vld [vmem:[#allocation2] sm:$0xff]
    %v118 = vld [vmem:[#allocation2 + $0x8] sm:$0xff]
    %v119 = vld [vmem:[#allocation2 + $0x10] sm:$0xff]
    %v120 = vld [vmem:[#allocation2 + $0x18] sm:$0xff]
    %v121 = vld [vmem:[#allocation2 + $0x20] sm:$0xff]
    %v122 = vld [vmem:[#allocation2 + $0x28] sm:$0xff]
    %v123 = vld [vmem:[#allocation2 + $0x30] sm:$0xff]
    %v124 = vld [vmem:[#allocation2 + $0x38] sm:$0xff]
    %v125 = vld [vmem:[#allocation2 + $0x40] sm:$0xff]
    %v126 = vld [vmem:[#allocation2 + $0x48] sm:$0xff]
    %v127 = vld [vmem:[#allocation2 + $0x50] sm:$0xff]
    %v128 = vld [vmem:[#allocation2 + $0x58] sm:$0xff]
    %v129 = vld [vmem:[#allocation2 + $0x60] sm:$0xff]
    %v130 = vld [vmem:[#allocation2 + $0x68] sm:$0xff]
    %v131 = vld [vmem:[#allocation2 + $0x70] sm:$0xff]
    %v132 = vld [vmem:[#allocation2 + $0x78] sm:$0xff]
    %133 = vmatprep.subr.mxu0 0.0
    %134 = vmatpush1.msra.mxu0 %v117
    %135 = vmatprep.subr.mxu0 0.0
    %136 = vmatpush1.msra.mxu0 %v118
    %137 = vmatprep.subr.mxu0 0.0
    %138 = vmatpush1.msra.mxu0 %v119
    %139 = vmatprep.subr.mxu0 0.0
    %140 = vmatpush1.msra.mxu0 %v120
    %141 = vmatprep.subr.mxu0 0.0
    %142 = vmatpush1.msra.mxu0 %v121
    %143 = vmatprep.subr.mxu0 0.0
    %144 = vmatpush1.msra.mxu0 %v122
    %145 = vmatprep.subr.mxu0 0.0
    %146 = vmatpush1.msra.mxu0 %v123
    %147 = vmatprep.subr.mxu0 0.0
    %148 = vmatpush1.msra.mxu0 %v124
    %149 = vmatprep.subr.mxu0 0.0
    %150 = vmatpush1.msra.mxu0 %v125
    %151 = vmatprep.subr.mxu0 0.0
    %152 = vmatpush1.msra.mxu0 %v126
    %153 = vmatprep.subr.mxu0 0.0
    %154 = vmatpush1.msra.mxu0 %v127
    %155 = vmatprep.subr.mxu0 0.0
    %156 = vmatpush1.msra.mxu0 %v128
    %157 = vmatprep.subr.mxu0 0.0
    %158 = vmatpush1.msra.mxu0 %v129
    %159 = vmatprep.subr.mxu0 0.0
    %160 = vmatpush1.msra.mxu0 %v130
    %161 = vmatprep.subr.mxu0 0.0
    %162 = vmatpush1.msra.mxu0 %v131
    %163 = vmatprep.subr.mxu0 0.0
    %164 = vmatpush1.msra.mxu0 %v132
    %165 = vmatprep.subr.mxu0 0.0
    %166 = vmatpush1.msra.mxu0 0.0
    %167 = vmatprep.subr.mxu0 0.0
    %168 = vmatpush1.msra.mxu0 0.0
    %169 = vmatprep.subr.mxu0 0.0
    %170 = vmatpush1.msra.mxu0 0.0
    %171 = vmatprep.subr.mxu0 0.0
    %172 = vmatpush1.msra.mxu0 0.0
    %173 = vmatprep.subr.mxu0 0.0
    %174 = vmatpush1.msra.mxu0 0.0
    %175 = vmatprep.subr.mxu0 0.0
    %176 = vmatpush1.msra.mxu0 0.0
    %177 = vmatprep.subr.mxu0 0.0
    %178 = vmatpush1.msra.mxu0 0.0
    %179 = vmatprep.subr.mxu0 0.0
    %180 = vmatpush1.msra.mxu0 0.0
    %181 = vmatprep.subr.mxu0 0.0
    %182 = vmatpush1.msra.mxu0 0.0
    %183 = vmatprep.subr.mxu0 0.0
    %184 = vmatpush1.msra.mxu0 0.0
    %185 = vmatprep.subr.mxu0 0.0
    %186 = vmatpush1.msra.mxu0 0.0
    %187 = vmatprep.subr.mxu0 0.0
    %188 = vmatpush1.msra.mxu0 0.0
    %189 = vmatprep.subr.mxu0 0.0
    %190 = vmatpush1.msra.mxu0 0.0
    %191 = vmatprep.subr.mxu0 0.0
    %192 = vmatpush1.msra.mxu0 0.0
    %193 = vmatprep.subr.mxu0 0.0
    %194 = vmatpush1.msra.mxu0 0.0
    %195 = vmatprep.subr.mxu0 0.0
    %196 = vmatpush1.msra.mxu0 0.0
    %197 = vmatprep.mubr.f32.mxu0 0.0
    %198 = vmatmul.mubr.f32.gmra.mrb[0].mxu0 %v116
    %v199 = vpop.f32.mrb[0].mxu0
    %v200 = vadd.f32 0.0, %v199
    %v201 = vpop.f32.mrb[0].mxu0
    %202 = vdwg.mxu0
    %v203 = vld [vmem:[%s1] sm:$0xff]
    %v204 = vld [vmem:[#allocation4] sm:$0xff]
    %v205 = vld [vmem:[#allocation4 + $0x8] sm:$0xff]
    %v206 = vld [vmem:[#allocation4 + $0x10] sm:$0xff]
    %v207 = vld [vmem:[#allocation4 + $0x18] sm:$0xff]
    %v208 = vld [vmem:[#allocation4 + $0x20] sm:$0xff]
    %v209 = vld [vmem:[#allocation4 + $0x28] sm:$0xff]
    %v210 = vld [vmem:[#allocation4 + $0x30] sm:$0xff]
    %v211 = vld [vmem:[#allocation4 + $0x38] sm:$0xff]
    %v212 = vld [vmem:[#allocation4 + $0x40] sm:$0xff]
    %v213 = vld [vmem:[#allocation4 + $0x48] sm:$0xff]
    %v214 = vld [vmem:[#allocation4 + $0x50] sm:$0xff]
    %v215 = vld [vmem:[#allocation4 + $0x58] sm:$0xff]
    %v216 = vld [vmem:[#allocation4 + $0x60] sm:$0xff]
    %v217 = vld [vmem:[#allocation4 + $0x68] sm:$0xff]
    %v218 = vld [vmem:[#allocation4 + $0x70] sm:$0xff]
    %v219 = vld [vmem:[#allocation4 + $0x78] sm:$0xff]
    %v220 = vld [vmem:[#allocation4 + $0x80] sm:$0xff]
    %v221 = vld [vmem:[#allocation4 + $0x88] sm:$0xff]
    %v222 = vld [vmem:[#allocation4 + $0x90] sm:$0xff]
    %v223 = vld [vmem:[#allocation4 + $0x98] sm:$0xff]
    %v224 = vld [vmem:[#allocation4 + $0xa0] sm:$0xff]
    %v225 = vld [vmem:[#allocation4 + $0xa8] sm:$0xff]
    %v226 = vld [vmem:[#allocation4 + $0xb0] sm:$0xff]
    %v227 = vld [vmem:[#allocation4 + $0xb8] sm:$0xff]
    %v228 = vld [vmem:[#allocation4 + $0xc0] sm:$0xff]
    %v229 = vld [vmem:[#allocation4 + $0xc8] sm:$0xff]
    %v230 = vld [vmem:[#allocation4 + $0xd0] sm:$0xff]
    %v231 = vld [vmem:[#allocation4 + $0xd8] sm:$0xff]
    %v232 = vld [vmem:[#allocation4 + $0xe0] sm:$0xff]
    %v233 = vld [vmem:[#allocation4 + $0xe8] sm:$0xff]
    %v234 = vld [vmem:[#allocation4 + $0xf0] sm:$0xff]
    %v235 = vld [vmem:[#allocation4 + $0xf8] sm:$0xff]
    %v236 = vld [vmem:[#allocation4 + $0x100] sm:$0xff]
    %v237 = vld [vmem:[#allocation4 + $0x108] sm:$0xff]
    %v238 = vld [vmem:[#allocation4 + $0x110] sm:$0xff]
    %v239 = vld [vmem:[#allocation4 + $0x118] sm:$0xff]
    %v240 = vld [vmem:[#allocation4 + $0x120] sm:$0xff]
    %v241 = vld [vmem:[#allocation4 + $0x128] sm:$0xff]
    %v242 = vld [vmem:[#allocation4 + $0x130] sm:$0xff]
    %v243 = vld [vmem:[#allocation4 + $0x138] sm:$0xff]
    %v244 = vld [vmem:[#allocation4 + $0x140] sm:$0xff]
    %v245 = vld [vmem:[#allocation4 + $0x148] sm:$0xff]
    %v246 = vld [vmem:[#allocation4 + $0x150] sm:$0xff]
    %v247 = vld [vmem:[#allocation4 + $0x158] sm:$0xff]
    %v248 = vld [vmem:[#allocation4 + $0x160] sm:$0xff]
    %v249 = vld [vmem:[#allocation4 + $0x168] sm:$0xff]
    %v250 = vld [vmem:[#allocation4 + $0x170] sm:$0xff]
    %v251 = vld [vmem:[#allocation4 + $0x178] sm:$0xff]
    %v252 = vld [vmem:[%s5] sm:$0x7]
    %v254 = vlaneseq
    %v255 = vshrl.u32 %v254, 7
    %v256 = vsub.s32 0, %v255
    %v257 = vrot.slane %v252, %v256
    %v258 = vlaneseq
    %v259 = vshrl.u32 %v258, 7
    %v260 = vsub.s32 1, %v259
    %v261 = vrot.slane %v252, %v260
    %v262 = vlaneseq
    %v263 = vshrl.u32 %v262, 7
    %v264 = vsub.s32 2, %v263
    %v265 = vrot.slane %v252, %v264
    %269 = vmatprep.subr.mxu0 %v205
    %270 = vmatpush1.msra.mxu0 %v204
    %271 = vmatprep.subr.mxu0 %v208
    %272 = vmatpush1.msra.mxu0 %v207
    %273 = vmatprep.subr.mxu0 %v211
    %274 = vmatpush1.msra.mxu0 %v210
    %275 = vmatprep.subr.mxu0 %v214
    %276 = vmatpush1.msra.mxu0 %v213
    %277 = vmatprep.subr.mxu0 %v217
    %278 = vmatpush1.msra.mxu0 %v216
    %279 = vmatprep.subr.mxu0 %v220
    %280 = vmatpush1.msra.mxu0 %v219
    %281 = vmatprep.subr.mxu0 %v223
    %282 = vmatpush1.msra.mxu0 %v222
    %283 = vmatprep.subr.mxu0 %v226
    %284 = vmatpush1.msra.mxu0 %v225
    %285 = vmatprep.subr.mxu0 %v229
    %286 = vmatpush1.msra.mxu0 %v228
    %287 = vmatprep.subr.mxu0 %v232
    %288 = vmatpush1.msra.mxu0 %v231
    %289 = vmatprep.subr.mxu0 %v235
    %290 = vmatpush1.msra.mxu0 %v234
    %291 = vmatprep.subr.mxu0 %v238
    %292 = vmatpush1.msra.mxu0 %v237
    %293 = vmatprep.subr.mxu0 %v241
    %294 = vmatpush1.msra.mxu0 %v240
    %295 = vmatprep.subr.mxu0 %v244
    %296 = vmatpush1.msra.mxu0 %v243
    %297 = vmatprep.subr.mxu0 %v247
    %298 = vmatpush1.msra.mxu0 %v246
    %299 = vmatprep.subr.mxu0 %v250
    %300 = vmatpush1.msra.mxu0 %v249
    %301 = vmatprep.subr.mxu0 0.0
    %302 = vmatpush1.msra.mxu0 0.0
    %303 = vmatprep.subr.mxu0 0.0
    %304 = vmatpush1.msra.mxu0 0.0
    %305 = vmatprep.subr.mxu0 0.0
    %306 = vmatpush1.msra.mxu0 0.0
    %307 = vmatprep.subr.mxu0 0.0
    %308 = vmatpush1.msra.mxu0 0.0
    %309 = vmatprep.subr.mxu0 0.0
    %310 = vmatpush1.msra.mxu0 0.0
    %311 = vmatprep.subr.mxu0 0.0
    %312 = vmatpush1.msra.mxu0 0.0
    %313 = vmatprep.subr.mxu0 0.0
    %314 = vmatpush1.msra.mxu0 0.0
    %315 = vmatprep.subr.mxu0 0.0
    %316 = vmatpush1.msra.mxu0 0.0
    %317 = vmatprep.subr.mxu0 0.0
    %318 = vmatpush1.msra.mxu0 0.0
    %319 = vmatprep.subr.mxu0 0.0
    %320 = vmatpush1.msra.mxu0 0.0
    %321 = vmatprep.subr.mxu0 0.0
    %322 = vmatpush1.msra.mxu0 0.0
    %323 = vmatprep.subr.mxu0 0.0
    %324 = vmatpush1.msra.mxu0 0.0
    %325 = vmatprep.subr.mxu0 0.0
    %326 = vmatpush1.msra.mxu0 0.0
    %327 = vmatprep.subr.mxu0 0.0
    %328 = vmatpush1.msra.mxu0 0.0
    %329 = vmatprep.subr.mxu0 0.0
    %330 = vmatpush1.msra.mxu0 0.0
    %331 = vmatprep.subr.mxu0 0.0
    %332 = vmatpush1.msra.mxu0 0.0
    %333 = vmatprep.mubr.f32.mxu0 0.0
    %334 = vmatmul.mubr.f32.gmra.mrb[0].mxu0 %v200
    %v335 = vpop.f32.mrb[0].mxu0
    %v336 = vadd.f32 %v257, %v335
    %v337 = vpop.f32.mrb[0].mxu0
    %v338 = vadd.f32 %v261, %v337
    %339 = vdwg.mxu0
    %340 = vmatprep.subr.mxu0 0.0
    %341 = vmatpush1.msra.mxu0 %v206
    %342 = vmatprep.subr.mxu0 0.0
    %343 = vmatpush1.msra.mxu0 %v209
    %344 = vmatprep.subr.mxu0 0.0
    %345 = vmatpush1.msra.mxu0 %v212
    %346 = vmatprep.subr.mxu0 0.0
    %347 = vmatpush1.msra.mxu0 %v215
    %348 = vmatprep.subr.mxu0 0.0
    %349 = vmatpush1.msra.mxu0 %v218
    %350 = vmatprep.subr.mxu0 0.0
    %351 = vmatpush1.msra.mxu0 %v221
    %352 = vmatprep.subr.mxu0 0.0
    %353 = vmatpush1.msra.mxu0 %v224
    %354 = vmatprep.subr.mxu0 0.0
    %355 = vmatpush1.msra.mxu0 %v227
    %356 = vmatprep.subr.mxu0 0.0
    %357 = vmatpush1.msra.mxu0 %v230
    %358 = vmatprep.subr.mxu0 0.0
    %359 = vmatpush1.msra.mxu0 %v233
    %360 = vmatprep.subr.mxu0 0.0
    %361 = vmatpush1.msra.mxu0 %v236
    %362 = vmatprep.subr.mxu0 0.0
    %363 = vmatpush1.msra.mxu0 %v239
    %364 = vmatprep.subr.mxu0 0.0
    %365 = vmatpush1.msra.mxu0 %v242
    %366 = vmatprep.subr.mxu0 0.0
    %367 = vmatpush1.msra.mxu0 %v245
    %368 = vmatprep.subr.mxu0 0.0
    %369 = vmatpush1.msra.mxu0 %v248
    %370 = vmatprep.subr.mxu0 0.0
    %371 = vmatpush1.msra.mxu0 %v251
    %372 = vmatprep.subr.mxu0 0.0
    %373 = vmatpush1.msra.mxu0 0.0
    %374 = vmatprep.subr.mxu0 0.0
    %375 = vmatpush1.msra.mxu0 0.0
    %376 = vmatprep.subr.mxu0 0.0
    %377 = vmatpush1.msra.mxu0 0.0
    %378 = vmatprep.subr.mxu0 0.0
    %379 = vmatpush1.msra.mxu0 0.0
    %380 = vmatprep.subr.mxu0 0.0
    %381 = vmatpush1.msra.mxu0 0.0
    %382 = vmatprep.subr.mxu0 0.0
    %383 = vmatpush1.msra.mxu0 0.0
    %384 = vmatprep.subr.mxu0 0.0
    %385 = vmatpush1.msra.mxu0 0.0
    %386 = vmatprep.subr.mxu0 0.0
    %387 = vmatpush1.msra.mxu0 0.0
    %388 = vmatprep.subr.mxu0 0.0
    %389 = vmatpush1.msra.mxu0 0.0
    %390 = vmatprep.subr.mxu0 0.0
    %391 = vmatpush1.msra.mxu0 0.0
    %392 = vmatprep.subr.mxu0 0.0
    %393 = vmatpush1.msra.mxu0 0.0
    %394 = vmatprep.subr.mxu0 0.0
    %395 = vmatpush1.msra.mxu0 0.0
    %396 = vmatprep.subr.mxu0 0.0
    %397 = vmatpush1.msra.mxu0 0.0
    %398 = vmatprep.subr.mxu0 0.0
    %399 = vmatpush1.msra.mxu0 0.0
    %400 = vmatprep.subr.mxu0 0.0
    %401 = vmatpush1.msra.mxu0 0.0
    %402 = vmatprep.subr.mxu0 0.0
    %403 = vmatpush1.msra.mxu0 0.0
    %404 = vmatprep.mubr.f32.mxu0 0.0
    %405 = vmatmul.mubr.f32.gmra.mrb[0].mxu0 %v200
    %v406 = vpop.f32.mrb[0].mxu0
    %v407 = vadd.f32 %v265, %v406
    %v408 = vpop.f32.mrb[0].mxu0
    %409 = vdwg.mxu0
    %v410 = vld [vmem:[#allocation6] sm:$0xff]
    %v411 = vld [vmem:[#allocation6 + $0x8] sm:$0xff]
    %v412 = vld [vmem:[#allocation6 + $0x10] sm:$0xff]
    %v413 = vld [vmem:[#allocation6 + $0x18] sm:$0xff]
    %v414 = vld [vmem:[#allocation6 + $0x20] sm:$0xff]
    %v415 = vld [vmem:[#allocation6 + $0x28] sm:$0xff]
    %v416 = vld [vmem:[#allocation6 + $0x30] sm:$0xff]
    %v417 = vld [vmem:[#allocation6 + $0x38] sm:$0xff]
    %v418 = vld [vmem:[#allocation6 + $0x40] sm:$0xff]
    %v419 = vld [vmem:[#allocation6 + $0x48] sm:$0xff]
    %v420 = vld [vmem:[#allocation6 + $0x50] sm:$0xff]
    %v421 = vld [vmem:[#allocation6 + $0x58] sm:$0xff]
    %v422 = vld [vmem:[#allocation6 + $0x60] sm:$0xff]
    %v423 = vld [vmem:[#allocation6 + $0x68] sm:$0xff]
    %v424 = vld [vmem:[#allocation6 + $0x70] sm:$0xff]
    %v425 = vld [vmem:[#allocation6 + $0x78] sm:$0xff]
    %v426 = vld [vmem:[#allocation6 + $0x80] sm:$0xff]
    %v427 = vld [vmem:[#allocation6 + $0x88] sm:$0xff]
    %v428 = vld [vmem:[#allocation6 + $0x90] sm:$0xff]
    %v429 = vld [vmem:[#allocation6 + $0x98] sm:$0xff]
    %v430 = vld [vmem:[#allocation6 + $0xa0] sm:$0xff]
    %v431 = vld [vmem:[#allocation6 + $0xa8] sm:$0xff]
    %v432 = vld [vmem:[#allocation6 + $0xb0] sm:$0xff]
    %v433 = vld [vmem:[#allocation6 + $0xb8] sm:$0xff]
    %v434 = vld [vmem:[#allocation6 + $0xc0] sm:$0xff]
    %v435 = vld [vmem:[#allocation6 + $0xc8] sm:$0xff]
    %v436 = vld [vmem:[#allocation6 + $0xd0] sm:$0xff]
    %v437 = vld [vmem:[#allocation6 + $0xd8] sm:$0xff]
    %v438 = vld [vmem:[#allocation6 + $0xe0] sm:$0xff]
    %v439 = vld [vmem:[#allocation6 + $0xe8] sm:$0xff]
    %v440 = vld [vmem:[#allocation6 + $0xf0] sm:$0xff]
    %v441 = vld [vmem:[#allocation6 + $0xf8] sm:$0xff]
    %v442 = vld [vmem:[#allocation6 + $0x100] sm:$0xff]
    %v443 = vld [vmem:[#allocation6 + $0x108] sm:$0xff]
    %v444 = vld [vmem:[#allocation6 + $0x110] sm:$0xff]
    %v445 = vld [vmem:[#allocation6 + $0x118] sm:$0xff]
    %v446 = vld [vmem:[#allocation6 + $0x120] sm:$0xff]
    %v447 = vld [vmem:[#allocation6 + $0x128] sm:$0xff]
    %v448 = vld [vmem:[#allocation6 + $0x130] sm:$0xff]
    %v449 = vld [vmem:[#allocation6 + $0x138] sm:$0xff]
    %v450 = vld [vmem:[#allocation6 + $0x140] sm:$0xff]
    %v451 = vld [vmem:[#allocation6 + $0x148] sm:$0xff]
    %v452 = vld [vmem:[#allocation6 + $0x150] sm:$0xff]
    %v453 = vld [vmem:[#allocation6 + $0x158] sm:$0xff]
    %v454 = vld [vmem:[#allocation6 + $0x160] sm:$0xff]
    %v455 = vld [vmem:[#allocation6 + $0x168] sm:$0xff]
    %v456 = vld [vmem:[#allocation6 + $0x170] sm:$0xff]
    %v457 = vld [vmem:[#allocation6 + $0x178] sm:$0xff]
    %458 = vmatprep.subr.mxu0 %v411
    %459 = vmatpush1.msra.mxu0 %v410
    %460 = vmatprep.subr.mxu0 %v414
    %461 = vmatpush1.msra.mxu0 %v413
    %462 = vmatprep.subr.mxu0 %v417
    %463 = vmatpush1.msra.mxu0 %v416
    %464 = vmatprep.subr.mxu0 %v420
    %465 = vmatpush1.msra.mxu0 %v419
    %466 = vmatprep.subr.mxu0 %v423
    %467 = vmatpush1.msra.mxu0 %v422
    %468 = vmatprep.subr.mxu0 %v426
    %469 = vmatpush1.msra.mxu0 %v425
    %470 = vmatprep.subr.mxu0 %v429
    %471 = vmatpush1.msra.mxu0 %v428
    %472 = vmatprep.subr.mxu0 %v432
    %473 = vmatpush1.msra.mxu0 %v431
    %474 = vmatprep.subr.mxu0 %v435
    %475 = vmatpush1.msra.mxu0 %v434
    %476 = vmatprep.subr.mxu0 %v438
    %477 = vmatpush1.msra.mxu0 %v437
    %478 = vmatprep.subr.mxu0 %v441
    %479 = vmatpush1.msra.mxu0 %v440
    %480 = vmatprep.subr.mxu0 %v444
    %481 = vmatpush1.msra.mxu0 %v443
    %482 = vmatprep.subr.mxu0 %v447
    %483 = vmatpush1.msra.mxu0 %v446
    %484 = vmatprep.subr.mxu0 %v450
    %485 = vmatpush1.msra.mxu0 %v449
    %486 = vmatprep.subr.mxu0 %v453
    %487 = vmatpush1.msra.mxu0 %v452
    %488 = vmatprep.subr.mxu0 %v456
    %489 = vmatpush1.msra.mxu0 %v455
    %490 = vmatprep.subr.mxu0 0.0
    %491 = vmatpush1.msra.mxu0 0.0
    %492 = vmatprep.subr.mxu0 0.0
    %493 = vmatpush1.msra.mxu0 0.0
    %494 = vmatprep.subr.mxu0 0.0
    %495 = vmatpush1.msra.mxu0 0.0
    %496 = vmatprep.subr.mxu0 0.0
    %497 = vmatpush1.msra.mxu0 0.0
    %498 = vmatprep.subr.mxu0 0.0
    %499 = vmatpush1.msra.mxu0 0.0
    %500 = vmatprep.subr.mxu0 0.0
    %501 = vmatpush1.msra.mxu0 0.0
    %502 = vmatprep.subr.mxu0 0.0
    %503 = vmatpush1.msra.mxu0 0.0
    %504 = vmatprep.subr.mxu0 0.0
    %505 = vmatpush1.msra.mxu0 0.0
    %506 = vmatprep.subr.mxu0 0.0
    %507 = vmatpush1.msra.mxu0 0.0
    %508 = vmatprep.subr.mxu0 0.0
    %509 = vmatpush1.msra.mxu0 0.0
    %510 = vmatprep.subr.mxu0 0.0
    %511 = vmatpush1.msra.mxu0 0.0
    %512 = vmatprep.subr.mxu0 0.0
    %513 = vmatpush1.msra.mxu0 0.0
    %514 = vmatprep.subr.mxu0 0.0
    %515 = vmatpush1.msra.mxu0 0.0
    %516 = vmatprep.subr.mxu0 0.0
    %517 = vmatpush1.msra.mxu0 0.0
    %518 = vmatprep.subr.mxu0 0.0
    %519 = vmatpush1.msra.mxu0 0.0
    %520 = vmatprep.subr.mxu0 0.0
    %521 = vmatpush1.msra.mxu0 0.0
    %522 = vmatprep.mubr.f32.mxu0 0.0
    %523 = vmatmul.mubr.f32.gmra.mrb[0].mxu0 %v203
    %v524 = vpop.f32.mrb[0].mxu0
    %v525 = vadd.f32 0.0, %v524
    %v526 = vpop.f32.mrb[0].mxu0
    %v527 = vadd.f32 0.0, %v526
    %528 = vdwg.mxu0
    %529 = vmatprep.subr.mxu0 0.0
    %530 = vmatpush1.msra.mxu0 %v412
    %531 = vmatprep.subr.mxu0 0.0
    %532 = vmatpush1.msra.mxu0 %v415
    %533 = vmatprep.subr.mxu0 0.0
    %534 = vmatpush1.msra.mxu0 %v418
    %535 = vmatprep.subr.mxu0 0.0
    %536 = vmatpush1.msra.mxu0 %v421
    %537 = vmatprep.subr.mxu0 0.0
    %538 = vmatpush1.msra.mxu0 %v424
    %539 = vmatprep.subr.mxu0 0.0
    %540 = vmatpush1.msra.mxu0 %v427
    %541 = vmatprep.subr.mxu0 0.0
    %542 = vmatpush1.msra.mxu0 %v430
    %543 = vmatprep.subr.mxu0 0.0
    %544 = vmatpush1.msra.mxu0 %v433
    %545 = vmatprep.subr.mxu0 0.0
    %546 = vmatpush1.msra.mxu0 %v436
    %547 = vmatprep.subr.mxu0 0.0
    %548 = vmatpush1.msra.mxu0 %v439
    %549 = vmatprep.subr.mxu0 0.0
    %550 = vmatpush1.msra.mxu0 %v442
    %551 = vmatprep.subr.mxu0 0.0
    %552 = vmatpush1.msra.mxu0 %v445
    %553 = vmatprep.subr.mxu0 0.0
    %554 = vmatpush1.msra.mxu0 %v448
    %555 = vmatprep.subr.mxu0 0.0
    %556 = vmatpush1.msra.mxu0 %v451
    %557 = vmatprep.subr.mxu0 0.0
    %558 = vmatpush1.msra.mxu0 %v454
    %559 = vmatprep.subr.mxu0 0.0
    %560 = vmatpush1.msra.mxu0 %v457
    %561 = vmatprep.subr.mxu0 0.0
    %562 = vmatpush1.msra.mxu0 0.0
    %563 = vmatprep.subr.mxu0 0.0
    %564 = vmatpush1.msra.mxu0 0.0
    %565 = vmatprep.subr.mxu0 0.0
    %566 = vmatpush1.msra.mxu0 0.0
    %567 = vmatprep.subr.mxu0 0.0
    %568 = vmatpush1.msra.mxu0 0.0
    %569 = vmatprep.subr.mxu0 0.0
    %570 = vmatpush1.msra.mxu0 0.0
    %571 = vmatprep.subr.mxu0 0.0
    %572 = vmatpush1.msra.mxu0 0.0
    %573 = vmatprep.subr.mxu0 0.0
    %574 = vmatpush1.msra.mxu0 0.0
    %575 = vmatprep.subr.mxu0 0.0
    %576 = vmatpush1.msra.mxu0 0.0
    %577 = vmatprep.subr.mxu0 0.0
    %578 = vmatpush1.msra.mxu0 0.0
    %579 = vmatprep.subr.mxu0 0.0
    %580 = vmatpush1.msra.mxu0 0.0
    %581 = vmatprep.subr.mxu0 0.0
    %582 = vmatpush1.msra.mxu0 0.0
    %583 = vmatprep.subr.mxu0 0.0
    %584 = vmatpush1.msra.mxu0 0.0
    %585 = vmatprep.subr.mxu0 0.0
    %586 = vmatpush1.msra.mxu0 0.0
    %587 = vmatprep.subr.mxu0 0.0
    %588 = vmatpush1.msra.mxu0 0.0
    %589 = vmatprep.subr.mxu0 0.0
    %590 = vmatpush1.msra.mxu0 0.0
    %591 = vmatprep.subr.mxu0 0.0
    %592 = vmatpush1.msra.mxu0 0.0
    %593 = vmatprep.mubr.f32.mxu0 0.0
    %594 = vmatmul.mubr.f32.gmra.mrb[0].mxu0 %v203
    %v595 = vpop.f32.mrb[0].mxu0
    %v596 = vadd.f32 0.0, %v595
    %v597 = vpop.f32.mrb[0].mxu0
    %598 = vdwg.mxu0
    %v599 = vadd.f32 %v336, %v525
    %v600 = vxor.u32 %v599, 2147483648
    %v601 = vmul.f32 %v600, 1.442695
    %v602 = vpow.pop %v601
    %v603 = vadd.f32 %v602, 1.0
    %v604 = vrcp.pop %v603
    %v605 = vmul.f32 1.0, %v604
    %v606 = vadd.f32 %v338, %v527
    %v607 = vxor.u32 %v606, 2147483648
    %v608 = vmul.f32 %v607, 1.442695
    %v609 = vpow.pop %v608
    %v610 = vadd.f32 %v609, 1.0
    %v611 = vrcp.pop %v610
    %v612 = vmul.f32 1.0, %v611
    %v613 = vld [vmem:[%s6] sm:$0x1]
    %v615 = vlaneseq
    %v616 = vshrl.u32 %v615, 7
    %v617 = vsub.s32 0, %v616
    %v618 = vrot.slane %v613, %v617
    %v620 = vadd.f32 %v596, %v618
    %v621 = vmul.f32 %v605, %v620
    %v622 = vadd.f32 %v407, %v621
    %v623 = vtanh.pop %v622
    %v624 = vsub.f32 1.0, %v612
    %v625 = vmul.f32 %v624, %v623
    %v626 = vmul.f32 %v612, %v203
    %v627 = vadd.f32 %v625, %v626
    %v628 = vld [vmem:[#allocation7] sm:$0xff]
    %v629 = vld [vmem:[#allocation7 + $0x8] sm:$0xff]
    %v630 = vld [vmem:[#allocation7 + $0x10] sm:$0xff]
    %v631 = vld [vmem:[#allocation7 + $0x18] sm:$0xff]
    %v632 = vld [vmem:[#allocation7 + $0x20] sm:$0xff]
    %v633 = vld [vmem:[#allocation7 + $0x28] sm:$0xff]
    %v634 = vld [vmem:[#allocation7 + $0x30] sm:$0xff]
    %v635 = vld [vmem:[#allocation7 + $0x38] sm:$0xff]
    %v636 = vld [vmem:[#allocation7 + $0x40] sm:$0xff]
    %v637 = vld [vmem:[#allocation7 + $0x48] sm:$0xff]
    %v638 = vld [vmem:[#allocation7 + $0x50] sm:$0xff]
    %v639 = vld [vmem:[#allocation7 + $0x58] sm:$0xff]
    %v640 = vld [vmem:[#allocation7 + $0x60] sm:$0xff]
    %v641 = vld [vmem:[#allocation7 + $0x68] sm:$0xff]
    %v642 = vld [vmem:[#allocation7 + $0x70] sm:$0xff]
    %v643 = vld [vmem:[#allocation7 + $0x78] sm:$0xff]
    %v644 = vld [vmem:[#allocation7 + $0x80] sm:$0xff]
    %v645 = vld [vmem:[#allocation7 + $0x88] sm:$0xff]
    %v646 = vld [vmem:[#allocation7 + $0x90] sm:$0xff]
    %v647 = vld [vmem:[#allocation7 + $0x98] sm:$0xff]
    %v648 = vld [vmem:[#allocation7 + $0xa0] sm:$0xff]
    %v649 = vld [vmem:[#allocation7 + $0xa8] sm:$0xff]
    %v650 = vld [vmem:[#allocation7 + $0xb0] sm:$0xff]
    %v651 = vld [vmem:[#allocation7 + $0xb8] sm:$0xff]
    %v652 = vld [vmem:[#allocation7 + $0xc0] sm:$0xff]
    %v653 = vld [vmem:[#allocation7 + $0xc8] sm:$0xff]
    %v654 = vld [vmem:[#allocation7 + $0xd0] sm:$0xff]
    %v655 = vld [vmem:[#allocation7 + $0xd8] sm:$0xff]
    %v656 = vld [vmem:[#allocation7 + $0xe0] sm:$0xff]
    %v657 = vld [vmem:[#allocation7 + $0xe8] sm:$0xff]
    %v658 = vld [vmem:[#allocation7 + $0xf0] sm:$0xff]
    %v659 = vld [vmem:[#allocation7 + $0xf8] sm:$0xff]
    %v660 = vld [vmem:[#allocation7 + $0x100] sm:$0xff]
    %v661 = vld [vmem:[#allocation7 + $0x108] sm:$0xff]
    %v662 = vld [vmem:[#allocation7 + $0x110] sm:$0xff]
    %v663 = vld [vmem:[#allocation7 + $0x118] sm:$0xff]
    %v664 = vld [vmem:[#allocation7 + $0x120] sm:$0xff]
    %v665 = vld [vmem:[#allocation7 + $0x128] sm:$0xff]
    %v666 = vld [vmem:[#allocation7 + $0x130] sm:$0xff]
    %v667 = vld [vmem:[#allocation7 + $0x138] sm:$0xff]
    %v668 = vld [vmem:[#allocation7 + $0x140] sm:$0xff]
    %v669 = vld [vmem:[#allocation7 + $0x148] sm:$0xff]
    %v670 = vld [vmem:[#allocation7 + $0x150] sm:$0xff]
    %v671 = vld [vmem:[#allocation7 + $0x158] sm:$0xff]
    %v672 = vld [vmem:[#allocation7 + $0x160] sm:$0xff]
    %v673 = vld [vmem:[#allocation7 + $0x168] sm:$0xff]
    %v674 = vld [vmem:[#allocation7 + $0x170] sm:$0xff]
    %v675 = vld [vmem:[#allocation7 + $0x178] sm:$0xff]
    %v676 = vld [vmem:[%s8] sm:$0x7]
    %v678 = vlaneseq
    %v679 = vshrl.u32 %v678, 7
    %v680 = vsub.s32 0, %v679
    %v681 = vrot.slane %v676, %v680
    %v682 = vlaneseq
    %v683 = vshrl.u32 %v682, 7
    %v684 = vsub.s32 1, %v683
    %v685 = vrot.slane %v676, %v684
    %v686 = vlaneseq
    %v687 = vshrl.u32 %v686, 7
    %v688 = vsub.s32 2, %v687
    %v689 = vrot.slane %v676, %v688
    %693 = vmatprep.subr.mxu0 %v629
    %694 = vmatpush1.msra.mxu0 %v628
    %695 = vmatprep.subr.mxu0 %v632
    %696 = vmatpush1.msra.mxu0 %v631
    %697 = vmatprep.subr.mxu0 %v635
    %698 = vmatpush1.msra.mxu0 %v634
    %699 = vmatprep.subr.mxu0 %v638
    %700 = vmatpush1.msra.mxu0 %v637
    %701 = vmatprep.subr.mxu0 %v641
    %702 = vmatpush1.msra.mxu0 %v640
    %703 = vmatprep.subr.mxu0 %v644
    %704 = vmatpush1.msra.mxu0 %v643
    %705 = vmatprep.subr.mxu0 %v647
    %706 = vmatpush1.msra.mxu0 %v646
    %707 = vmatprep.subr.mxu0 %v650
    %708 = vmatpush1.msra.mxu0 %v649
    %709 = vmatprep.subr.mxu0 %v653
    %710 = vmatpush1.msra.mxu0 %v652
    %711 = vmatprep.subr.mxu0 %v656
    %712 = vmatpush1.msra.mxu0 %v655
    %713 = vmatprep.subr.mxu0 %v659
    %714 = vmatpush1.msra.mxu0 %v658
    %715 = vmatprep.subr.mxu0 %v662
    %716 = vmatpush1.msra.mxu0 %v661
    %717 = vmatprep.subr.mxu0 %v665
    %718 = vmatpush1.msra.mxu0 %v664
    %719 = vmatprep.subr.mxu0 %v668
    %720 = vmatpush1.msra.mxu0 %v667
    %721 = vmatprep.subr.mxu0 %v671
    %722 = vmatpush1.msra.mxu0 %v670
    %723 = vmatprep.subr.mxu0 %v674
    %724 = vmatpush1.msra.mxu0 %v673
    %725 = vmatprep.subr.mxu0 0.0
    %726 = vmatpush1.msra.mxu0 0.0
    %727 = vmatprep.subr.mxu0 0.0
    %728 = vmatpush1.msra.mxu0 0.0
    %729 = vmatprep.subr.mxu0 0.0
    %730 = vmatpush1.msra.mxu0 0.0
    %731 = vmatprep.subr.mxu0 0.0
    %732 = vmatpush1.msra.mxu0 0.0
    %733 = vmatprep.subr.mxu0 0.0
    %734 = vmatpush1.msra.mxu0 0.0
    %735 = vmatprep.subr.mxu0 0.0
    %736 = vmatpush1.msra.mxu0 0.0
    %737 = vmatprep.subr.mxu0 0.0
    %738 = vmatpush1.msra.mxu0 0.0
    %739 = vmatprep.subr.mxu0 0.0
    %740 = vmatpush1.msra.mxu0 0.0
    %741 = vmatprep.subr.mxu0 0.0
    %742 = vmatpush1.msra.mxu0 0.0
    %743 = vmatprep.subr.mxu0 0.0
    %744 = vmatpush1.msra.mxu0 0.0
    %745 = vmatprep.subr.mxu0 0.0
    %746 = vmatpush1.msra.mxu0 0.0
    %747 = vmatprep.subr.mxu0 0.0
    %748 = vmatpush1.msra.mxu0 0.0
    %749 = vmatprep.subr.mxu0 0.0
    %750 = vmatpush1.msra.mxu0 0.0
    %751 = vmatprep.subr.mxu0 0.0
    %752 = vmatpush1.msra.mxu0 0.0
    %753 = vmatprep.subr.mxu0 0.0
    %754 = vmatpush1.msra.mxu0 0.0
    %755 = vmatprep.subr.mxu0 0.0
    %756 = vmatpush1.msra.mxu0 0.0
    %757 = vmatprep.mubr.f32.mxu0 0.0
    %758 = vmatmul.mubr.f32.gmra.mrb[0].mxu0 %v627
    %v759 = vpop.f32.mrb[0].mxu0
    %v760 = vadd.f32 %v681, %v759
    %v761 = vpop.f32.mrb[0].mxu0
    %v762 = vadd.f32 %v685, %v761
    %763 = vdwg.mxu0
    %764 = vmatprep.subr.mxu0 0.0
    %765 = vmatpush1.msra.mxu0 %v630
    %766 = vmatprep.subr.mxu0 0.0
    %767 = vmatpush1.msra.mxu0 %v633
    %768 = vmatprep.subr.mxu0 0.0
    %769 = vmatpush1.msra.mxu0 %v636
    %770 = vmatprep.subr.mxu0 0.0
    %771 = vmatpush1.msra.mxu0 %v639
    %772 = vmatprep.subr.mxu0 0.0
    %773 = vmatpush1.msra.mxu0 %v642
    %774 = vmatprep.subr.mxu0 0.0
    %775 = vmatpush1.msra.mxu0 %v645
    %776 = vmatprep.subr.mxu0 0.0
    %777 = vmatpush1.msra.mxu0 %v648
    %778 = vmatprep.subr.mxu0 0.0
    %779 = vmatpush1.msra.mxu0 %v651
    %780 = vmatprep.subr.mxu0 0.0
    %781 = vmatpush1.msra.mxu0 %v654
    %782 = vmatprep.subr.mxu0 0.0
    %783 = vmatpush1.msra.mxu0 %v657
    %784 = vmatprep.subr.mxu0 0.0
    %785 = vmatpush1.msra.mxu0 %v660
    %786 = vmatprep.subr.mxu0 0.0
    %787 = vmatpush1.msra.mxu0 %v663
    %788 = vmatprep.subr.mxu0 0.0
    %789 = vmatpush1.msra.mxu0 %v666
    %790 = vmatprep.subr.mxu0 0.0
    %791 = vmatpush1.msra.mxu0 %v669
    %792 = vmatprep.subr.mxu0 0.0
    %793 = vmatpush1.msra.mxu0 %v672
    %794 = vmatprep.subr.mxu0 0.0
    %795 = vmatpush1.msra.mxu0 %v675
    %796 = vmatprep.subr.mxu0 0.0
    %797 = vmatpush1.msra.mxu0 0.0
    %798 = vmatprep.subr.mxu0 0.0
    %799 = vmatpush1.msra.mxu0 0.0
    %800 = vmatprep.subr.mxu0 0.0
    %801 = vmatpush1.msra.mxu0 0.0
    %802 = vmatprep.subr.mxu0 0.0
    %803 = vmatpush1.msra.mxu0 0.0
    %804 = vmatprep.subr.mxu0 0.0
    %805 = vmatpush1.msra.mxu0 0.0
    %806 = vmatprep.subr.mxu0 0.0
    %807 = vmatpush1.msra.mxu0 0.0
    %808 = vmatprep.subr.mxu0 0.0
    %809 = vmatpush1.msra.mxu0 0.0
    %810 = vmatprep.subr.mxu0 0.0
    %811 = vmatpush1.msra.mxu0 0.0
    %812 = vmatprep.subr.mxu0 0.0
    %813 = vmatpush1.msra.mxu0 0.0
    %814 = vmatprep.subr.mxu0 0.0
    %815 = vmatpush1.msra.mxu0 0.0
    %816 = vmatprep.subr.mxu0 0.0
    %817 = vmatpush1.msra.mxu0 0.0
    %818 = vmatprep.subr.mxu0 0.0
    %819 = vmatpush1.msra.mxu0 0.0
    %820 = vmatprep.subr.mxu0 0.0
    %821 = vmatpush1.msra.mxu0 0.0
    %822 = vmatprep.subr.mxu0 0.0
    %823 = vmatpush1.msra.mxu0 0.0
    %824 = vmatprep.subr.mxu0 0.0
    %825 = vmatpush1.msra.mxu0 0.0
    %826 = vmatprep.subr.mxu0 0.0
    %827 = vmatpush1.msra.mxu0 0.0
    %828 = vmatprep.mubr.f32.mxu0 0.0
    %829 = vmatmul.mubr.f32.gmra.mrb[0].mxu0 %v627
    %v830 = vpop.f32.mrb[0].mxu0
    %v831 = vadd.f32 %v689, %v830
    %v832 = vpop.f32.mrb[0].mxu0
    %833 = vdwg.mxu0
    %v834 = vxor.u32 %v760, 2147483648
    %v835 = vxor.u32 %v762, 2147483648
    %v836 = vxor.u32 %v831, 2147483648
    %v837 = vmul.f32 %v834, 1.442695
    %v838 = vpow.pop %v837
    %v839 = vmul.f32 %v835, 1.442695
    %v840 = vpow.pop %v839
    %v841 = vmul.f32 %v836, 1.442695
    %v842 = vpow.pop %v841
    %v843 = vadd.f32 %v838, 1.0
    %v844 = vadd.f32 %v840, 1.0
    %v845 = vadd.f32 %v842, 1.0
    %v846 = vrcp.pop %v843
    %v847 = vmul.f32 1.0, %v846
    %v848 = vrcp.pop %v844
    %v849 = vmul.f32 1.0, %v848
    %v850 = vrcp.pop %v845
    %v851 = vmul.f32 1.0, %v850
    %v852 = vld [vmem:[#allocation9] sm:$0xff]
    %v853 = vld [vmem:[#allocation9 + $0x8] sm:$0xff]
    %v854 = vld [vmem:[#allocation9 + $0x10] sm:$0xff]
    %v855 = vld [vmem:[#allocation9 + $0x18] sm:$0xff]
    %v856 = vld [vmem:[#allocation9 + $0x20] sm:$0xff]
    %v857 = vld [vmem:[#allocation9 + $0x28] sm:$0xff]
    %v858 = vld [vmem:[#allocation9 + $0x30] sm:$0xff]
    %v859 = vld [vmem:[#allocation9 + $0x38] sm:$0xff]
    %v860 = vld [vmem:[#allocation9 + $0x40] sm:$0xff]
    %v861 = vld [vmem:[#allocation9 + $0x48] sm:$0xff]
    %v862 = vld [vmem:[#allocation9 + $0x50] sm:$0xff]
    %v863 = vld [vmem:[#allocation9 + $0x58] sm:$0xff]
    %v864 = vld [vmem:[#allocation9 + $0x60] sm:$0xff]
    %v865 = vld [vmem:[#allocation9 + $0x68] sm:$0xff]
    %v866 = vld [vmem:[#allocation9 + $0x70] sm:$0xff]
    %v867 = vld [vmem:[#allocation9 + $0x78] sm:$0xff]
    %v868 = vld [vmem:[#allocation9 + $0x80] sm:$0xff]
    %v869 = vld [vmem:[#allocation9 + $0x88] sm:$0xff]
    %v870 = vld [vmem:[#allocation9 + $0x90] sm:$0xff]
    %v871 = vld [vmem:[#allocation9 + $0x98] sm:$0xff]
    %v872 = vld [vmem:[#allocation9 + $0xa0] sm:$0xff]
    %v873 = vld [vmem:[#allocation9 + $0xa8] sm:$0xff]
    %v874 = vld [vmem:[#allocation9 + $0xb0] sm:$0xff]
    %v875 = vld [vmem:[#allocation9 + $0xb8] sm:$0xff]
    %v876 = vld [vmem:[#allocation9 + $0xc0] sm:$0xff]
    %v877 = vld [vmem:[#allocation9 + $0xc8] sm:$0xff]
    %v878 = vld [vmem:[#allocation9 + $0xd0] sm:$0xff]
    %v879 = vld [vmem:[#allocation9 + $0xd8] sm:$0xff]
    %v880 = vld [vmem:[#allocation9 + $0xe0] sm:$0xff]
    %v881 = vld [vmem:[#allocation9 + $0xe8] sm:$0xff]
    %v882 = vld [vmem:[#allocation9 + $0xf0] sm:$0xff]
    %v883 = vld [vmem:[#allocation9 + $0xf8] sm:$0xff]
    %v884 = vld [vmem:[#allocation9 + $0x100] sm:$0xff]
    %v885 = vld [vmem:[#allocation9 + $0x108] sm:$0xff]
    %v886 = vld [vmem:[#allocation9 + $0x110] sm:$0xff]
    %v887 = vld [vmem:[#allocation9 + $0x118] sm:$0xff]
    %v888 = vld [vmem:[#allocation9 + $0x120] sm:$0xff]
    %v889 = vld [vmem:[#allocation9 + $0x128] sm:$0xff]
    %v890 = vld [vmem:[#allocation9 + $0x130] sm:$0xff]
    %v891 = vld [vmem:[#allocation9 + $0x138] sm:$0xff]
    %v892 = vld [vmem:[#allocation9 + $0x140] sm:$0xff]
    %v893 = vld [vmem:[#allocation9 + $0x148] sm:$0xff]
    %v894 = vld [vmem:[#allocation9 + $0x150] sm:$0xff]
    %v895 = vld [vmem:[#allocation9 + $0x158] sm:$0xff]
    %v896 = vld [vmem:[#allocation9 + $0x160] sm:$0xff]
    %v897 = vld [vmem:[#allocation9 + $0x168] sm:$0xff]
    %v898 = vld [vmem:[#allocation9 + $0x170] sm:$0xff]
    %v899 = vld [vmem:[#allocation9 + $0x178] sm:$0xff]
    %v900 = vld [vmem:[%s10] sm:$0x1]
    %v902 = vlaneseq
    %v903 = vshrl.u32 %v902, 7
    %v904 = vsub.s32 0, %v903
    %v905 = vrot.slane %v900, %v904
    %907 = vmatprep.subr.mxu0 0.0
    %908 = vmatpush1.msra.mxu0 %v852
    %909 = vmatprep.subr.mxu0 0.0
    %910 = vmatpush1.msra.mxu0 %v853
    %911 = vmatprep.subr.mxu0 0.0
    %912 = vmatpush1.msra.mxu0 %v854
    %913 = vmatprep.subr.mxu0 0.0
    %914 = vmatpush1.msra.mxu0 %v855
    %915 = vmatprep.subr.mxu0 0.0
    %916 = vmatpush1.msra.mxu0 %v856
    %917 = vmatprep.subr.mxu0 0.0
    %918 = vmatpush1.msra.mxu0 %v857
    %919 = vmatprep.subr.mxu0 0.0
    %920 = vmatpush1.msra.mxu0 %v858
    %921 = vmatprep.subr.mxu0 0.0
    %922 = vmatpush1.msra.mxu0 %v859
    %923 = vmatprep.subr.mxu0 0.0
    %924 = vmatpush1.msra.mxu0 %v860
    %925 = vmatprep.subr.mxu0 0.0
    %926 = vmatpush1.msra.mxu0 %v861
    %927 = vmatprep.subr.mxu0 0.0
    %928 = vmatpush1.msra.mxu0 %v862
    %929 = vmatprep.subr.mxu0 0.0
    %930 = vmatpush1.msra.mxu0 %v863
    %931 = vmatprep.subr.mxu0 0.0
    %932 = vmatpush1.msra.mxu0 %v864
    %933 = vmatprep.subr.mxu0 0.0
    %934 = vmatpush1.msra.mxu0 %v865
    %935 = vmatprep.subr.mxu0 0.0
    %936 = vmatpush1.msra.mxu0 %v866
    %937 = vmatprep.subr.mxu0 0.0
    %938 = vmatpush1.msra.mxu0 %v867
    %939 = vmatprep.subr.mxu0 0.0
    %940 = vmatpush1.msra.mxu0 %v868
    %941 = vmatprep.subr.mxu0 0.0
    %942 = vmatpush1.msra.mxu0 %v869
    %943 = vmatprep.subr.mxu0 0.0
    %944 = vmatpush1.msra.mxu0 %v870
    %945 = vmatprep.subr.mxu0 0.0
    %946 = vmatpush1.msra.mxu0 %v871
    %947 = vmatprep.subr.mxu0 0.0
    %948 = vmatpush1.msra.mxu0 %v872
    %949 = vmatprep.subr.mxu0 0.0
    %950 = vmatpush1.msra.mxu0 %v873
    %951 = vmatprep.subr.mxu0 0.0
    %952 = vmatpush1.msra.mxu0 %v874
    %953 = vmatprep.subr.mxu0 0.0
    %954 = vmatpush1.msra.mxu0 %v875
    %955 = vmatprep.subr.mxu0 0.0
    %956 = vmatpush1.msra.mxu0 %v876
    %957 = vmatprep.subr.mxu0 0.0
    %958 = vmatpush1.msra.mxu0 %v877
    %959 = vmatprep.subr.mxu0 0.0
    %960 = vmatpush1.msra.mxu0 %v878
    %961 = vmatprep.subr.mxu0 0.0
    %962 = vmatpush1.msra.mxu0 %v879
    %963 = vmatprep.subr.mxu0 0.0
    %964 = vmatpush1.msra.mxu0 %v880
    %965 = vmatprep.subr.mxu0 0.0
    %966 = vmatpush1.msra.mxu0 %v881
    %967 = vmatprep.subr.mxu0 0.0
    %968 = vmatpush1.msra.mxu0 %v882
    %969 = vmatprep.subr.mxu0 0.0
    %970 = vmatpush1.msra.mxu0 %v883
    %971 = vmatprep.mubr.f32.mxu0 %v849
    %972 = vmatmul.mubr.f32.gmra.mrb[0].mxu0 %v847
    %v973 = vpop.f32.mrb[0].mxu0
    %v974 = vadd.f32 %v905, %v973
    %v975 = vpop.f32.mrb[0].mxu0
    %976 = vdwg.mxu0
    %977 = vmatprep.subr.mxu0 0.0
    %978 = vmatpush1.msra.mxu0 %v884
    %979 = vmatprep.subr.mxu0 0.0
    %980 = vmatpush1.msra.mxu0 %v885
    %981 = vmatprep.subr.mxu0 0.0
    %982 = vmatpush1.msra.mxu0 %v886
    %983 = vmatprep.subr.mxu0 0.0
    %984 = vmatpush1.msra.mxu0 %v887
    %985 = vmatprep.subr.mxu0 0.0
    %986 = vmatpush1.msra.mxu0 %v888
    %987 = vmatprep.subr.mxu0 0.0
    %988 = vmatpush1.msra.mxu0 %v889
    %989 = vmatprep.subr.mxu0 0.0
    %990 = vmatpush1.msra.mxu0 %v890
    %991 = vmatprep.subr.mxu0 0.0
    %992 = vmatpush1.msra.mxu0 %v891
    %993 = vmatprep.subr.mxu0 0.0
    %994 = vmatpush1.msra.mxu0 %v892
    %995 = vmatprep.subr.mxu0 0.0
    %996 = vmatpush1.msra.mxu0 %v893
    %997 = vmatprep.subr.mxu0 0.0
    %998 = vmatpush1.msra.mxu0 %v894
    %999 = vmatprep.subr.mxu0 0.0
    %1000 = vmatpush1.msra.mxu0 %v895
    %1001 = vmatprep.subr.mxu0 0.0
    %1002 = vmatpush1.msra.mxu0 %v896
    %1003 = vmatprep.subr.mxu0 0.0
    %1004 = vmatpush1.msra.mxu0 %v897
    %1005 = vmatprep.subr.mxu0 0.0
    %1006 = vmatpush1.msra.mxu0 %v898
    %1007 = vmatprep.subr.mxu0 0.0
    %1008 = vmatpush1.msra.mxu0 %v899
    %1009 = vmatprep.subr.mxu0 0.0
    %1010 = vmatpush1.msra.mxu0 0.0
    %1011 = vmatprep.subr.mxu0 0.0
    %1012 = vmatpush1.msra.mxu0 0.0
    %1013 = vmatprep.subr.mxu0 0.0
    %1014 = vmatpush1.msra.mxu0 0.0
    %1015 = vmatprep.subr.mxu0 0.0
    %1016 = vmatpush1.msra.mxu0 0.0
    %1017 = vmatprep.subr.mxu0 0.0
    %1018 = vmatpush1.msra.mxu0 0.0
    %1019 = vmatprep.subr.mxu0 0.0
    %1020 = vmatpush1.msra.mxu0 0.0
    %1021 = vmatprep.subr.mxu0 0.0
    %1022 = vmatpush1.msra.mxu0 0.0
    %1023 = vmatprep.subr.mxu0 0.0
    %1024 = vmatpush1.msra.mxu0 0.0
    %1025 = vmatprep.subr.mxu0 0.0
    %1026 = vmatpush1.msra.mxu0 0.0
    %1027 = vmatprep.subr.mxu0 0.0
    %1028 = vmatpush1.msra.mxu0 0.0
    %1029 = vmatprep.subr.mxu0 0.0
    %1030 = vmatpush1.msra.mxu0 0.0
    %1031 = vmatprep.subr.mxu0 0.0
    %1032 = vmatpush1.msra.mxu0 0.0
    %1033 = vmatprep.subr.mxu0 0.0
    %1034 = vmatpush1.msra.mxu0 0.0
    %1035 = vmatprep.subr.mxu0 0.0
    %1036 = vmatpush1.msra.mxu0 0.0
    %1037 = vmatprep.subr.mxu0 0.0
    %1038 = vmatpush1.msra.mxu0 0.0
    %1039 = vmatprep.subr.mxu0 0.0
    %1040 = vmatpush1.msra.mxu0 0.0
    %1041 = vmatprep.mubr.f32.mxu0 0.0
    %1042 = vmatmul.mubr.f32.gmra.mrb[0].mxu0 %v851
    %v1043 = vpop.f32.mrb[0].mxu0
    %v1044 = vadd.f32 %v974, %v1043
    %v1045 = vpop.f32.mrb[0].mxu0
    %1046 = vdwg.mxu0
    %1047 = vst [vmem:[%s11] sm:$0xff] %v1044
    %1048 = vst [vmem:[%s12] sm:$0xff] %v627
    // Predicated region
    $region66: #{decoder_forward.1} parent=1 // pred_check
      _
    $region67: #{decoder_forward.1} parent=1 // pred_check_branch
      %1050 = sbr.rel (0) target = $region69
    $region68: #{decoder_forward.1} parent=1 // pred_region
      _
    $region69: #{decoder_forward.1} parent=1 // pred_fallthru
      _
    // Predicated region
    $region70: #{decoder_forward.1} parent=1 // pred_check
      _
    $region71: #{decoder_forward.1} parent=1 // pred_check_branch
      %1052 = sbr.rel (0) target = $region73
    $region72: #{decoder_forward.1} parent=1 // pred_region
      _
    $region73: #{decoder_forward.1} parent=1 // pred_fallthru
      _
    // Predicated region
    $region74: #{decoder_forward.1} parent=1 // pred_check
      _
    $region75: #{decoder_forward.1} parent=1 // pred_check_branch
      %1054 = sbr.rel (0) target = $region77
    $region76: #{decoder_forward.1} parent=1 // pred_region
      _
    $region77: #{decoder_forward.1} parent=1 // pred_fallthru
      _
    // Predicated region
    $region78: #{decoder_forward.1} parent=1 // pred_check
      _
    $region79: #{decoder_forward.1} parent=1 // pred_check_branch
      %1056 = sbr.rel (0) target = $region81
    $region80: #{decoder_forward.1} parent=1 // pred_region
      _
    $region81: #{decoder_forward.1} parent=1 // pred_fallthru
      _
    %1057 = vsyncpa [#allocation3], 1
    %1058 = vsyncpa [#allocation5], 1
    %1059 = vsyncpa [#allocation8], 1

</llo_original>
